<compile_context>
chip_gen: v5e
topology: v5e:2x2
jax: 0.10.0
libtpu: 0.0.40
codegen_flags: <defaults>
</compile_context>

<pallas_src>
import math
import numpy as np
import jax
import jax.numpy as jnp
from jax.experimental import pallas as pl
from jax.experimental.pallas import tpu as pltpu


def _pair(v):
    if isinstance(v, (list, tuple)):
        assert len(v) == 2
        return tuple(v)
    return (v, v)


def make_gaussian_taps(kernel_size, sigma):
    """1-D Gaussian taps per spatial dim.  The module's 2-D kernel is exactly the
    (normalized) outer product of these, so the depthwise conv is separable."""
    ks = _pair(kernel_size)
    sg = _pair(sigma)
    taps = []
    for size, std in zip(ks, sg):
        size, std = int(size), float(std)
        mean = (size - 1) / 2.0
        g = (1.0 / (std * math.sqrt(2.0 * math.pi))
             * np.exp(-(((np.arange(size, dtype=np.float64) - mean) / std) ** 2) / 2.0))
        g = g / g.sum()
        taps.append([float(t) for t in g.astype(np.float32)])
    return taps[0], taps[1]


def make_gaussian_kernel_2d(kernel_size, sigma):
    """Replicates the PyTorch __init__ construction (dim=2) for the reference."""
    ks = _pair(kernel_size)
    sg = _pair(sigma)
    grids = np.meshgrid(*[np.arange(int(s), dtype=np.float32) for s in ks], indexing="ij")
    kernel = np.ones((), dtype=np.float32)
    for size, std, mgrid in zip(ks, sg, grids):
        mean = (int(size) - 1) / 2.0
        kernel = kernel * (1.0 / (float(std) * math.sqrt(2.0 * math.pi))
                           * np.exp(-(((mgrid - mean) / float(std)) ** 2) / 2.0))
    return (kernel / np.sum(kernel)).astype(np.float32)


def _vmem_limit_bytes():
    """Generation-aware VMEM limit: ~3/4 of physical VMEM (96 MiB on v5e/v6e,
    48 MiB on v7x), conservative 48 MiB fallback if the query is unavailable."""
    try:
        phys = int(pltpu.get_tpu_info().vmem_capacity_bytes)
    except Exception:
        phys = 64 * 1024 * 1024
    return max((phys * 3) // 4, 16 * 1024 * 1024)


def _pick_channel_block(C, HW, itemsize, budget_bytes, want_splits=1):
    """Largest channel block whose double-buffered in/out tiles plus the in-kernel
    f32/i32 temporaries fit the VMEM budget.  Block sublane dim must be a multiple
    of 8 or the full C.  If want_splits > 1, prefer blocks giving at least that
    many C-blocks (keeps both v7x TensorCores busy when N == 1)."""
    # 2x double-buffered (in + out) tiles + ~6 full-tile f32/i32 temporaries
    # (xv, flat/col iota, acc, rolled tap, out) + slack.
    per_chan = 2 * 2 * HW * itemsize + 6 * HW * 4 + 1024
    cands = [c for c in range(C, 0, -1) if C % c == 0 and (c == C or c % 8 == 0)]
    if want_splits > 1:
        split = [c for c in cands if C // c >= want_splits]
        if split:
            cands = split
    for cb in cands:
        if cb * per_chan <= budget_bytes:
            return cb
    return None


def gaussian_smoothing(x, kernel_size=3, sigma=1.0, padding=1):
    """Depthwise 2-D Gaussian smoothing of x: (N, C, H, W) (== the PyTorch module's
    forward: conv2d(weight=gaussian, groups=C, padding=padding))."""
    N, C, H, W = x.shape
    kh, kw = (int(k) for k in _pair(kernel_size))
    ph, pw = (int(p) for p in _pair(padding))
    if 2 * ph != kh - 1 or 2 * pw != kw - 1:
        # TODO(synk): only the 'same'-size config (2*pad == k-1, out H,W == in H,W)
        # is implemented; general padding needs an output-sized grid/blocking.
        raise NotImplementedError("gaussian_smoothing: need 2*padding == kernel_size - 1")
    tap_v, tap_h = make_gaussian_taps((kh, kw), sigma)

    HW = H * W
    itemsize = jnp.dtype(x.dtype).itemsize
    vmem_limit = _vmem_limit_bytes()
    budget = vmem_limit - 2 * 1024 * 1024          # fixed headroom; no //2 discount
    Cb = _pick_channel_block(C, HW, itemsize, budget,
                             want_splits=2 if N == 1 else 1)
    if Cb is None:
        # TODO(synk): tile H with a (kh-1)-row halo when even the smallest legal
        # (Cb, H*W) tile no longer fits VMEM (very large images, esp. on v7x).
        raise NotImplementedError("gaussian_smoothing: H*W too large for one VMEM tile")
    grid = (N, C // Cb)
    # TODO(synk): for W % 128 == 0 an (N, Cb, H, W) block layout with sublane-offset
    # vertical taps (lane-aligned loads) would remove the lane-realignment work; the
    # flat H*W lane layout below is the right choice for small W.

    x3 = x.reshape(N, C, HW)                       # free reshape; lane axis = H*W
    pow2_w = (W & (W - 1)) == 0

    def kernel(x_ref, o_ref):
        xv = x_ref[...].astype(jnp.float32)        # single upcast per tile
        flat = jax.lax.broadcasted_iota(jnp.int32, (Cb, HW), 1)

        # Vertical 1-D pass: XLU rolls of +-d*W lanes; boundary rows zeroed with
        # one flat-index compare per nonzero offset (masks hoisted out of the loop).
        vmask = {}
        for ki in range(kh):
            d = ki - ph
            if d < 0:
                vmask[d] = flat >= (-d) * W
            elif d > 0:
                vmask[d] = flat < HW - d * W
        acc = None
        for ki in range(kh):
            d = ki - ph
            y = xv if d == 0 else pltpu.roll(xv, (-d * W) % HW, axis=1)
            if d != 0:
                y = jnp.where(vmask[d], y, 0.0)
            t = tap_v[ki] * y
            acc = t if acc is None else acc + t    # first-tap init (no zeros+add)

        # Horizontal 1-D pass: +-pw lane rolls; lanes whose tap crosses a row
        # boundary are zeroed with precomputed column masks (& (W-1) when W is a
        # power of two -- no integer modulo on the VPU).
        col = (flat & (W - 1)) if pow2_w else (flat % W)
        hmask = {}
        for kj in range(kw):
            e = kj - pw
            if e < 0:
                hmask[e] = col >= -e
            elif e > 0:
                hmask[e] = col < W - e
        out = None
        for kj in range(kw):
            e = kj - pw
            y = acc if e == 0 else pltpu.roll(acc, (-e) % HW, axis=1)
            if e != 0:
                y = jnp.where(hmask[e], y, 0.0)
            t = tap_h[kj] * y
            out = t if out is None else out + t

        o_ref[...] = out.astype(o_ref.dtype)       # full-width lane-dense store

    cost = pl.CostEstimate(
        flops=2 * (kh + kw) * N * C * HW,
        transcendentals=0,
        bytes_accessed=2 * N * C * HW * itemsize,
    )
    out3 = pl.pallas_call(
        kernel,
        out_shape=jax.ShapeDtypeStruct((N, C, HW), x.dtype),
        grid=grid,
        in_specs=[pl.BlockSpec((None, Cb, HW), lambda n, c: (n, c, 0))],
        out_specs=pl.BlockSpec((None, Cb, HW), lambda n, c: (n, c, 0)),
        compiler_params=pltpu.CompilerParams(
            dimension_semantics=("parallel", "parallel"),
            vmem_limit_bytes=vmem_limit,
        ),
        cost_estimate=cost,
    )(x3)
    return out3.reshape(N, C, H, W)


def reference_depthwise_conv(x, kernel_size=3, sigma=1.0, padding=1):
    """Pure-JAX reference matching F.conv2d(..., groups=C)."""
    N, C, H, W = x.shape
    w2 = make_gaussian_kernel_2d(kernel_size, sigma)
    ph, pw = (int(p) for p in _pair(padding))
    wt = jnp.broadcast_to(jnp.asarray(w2)[None, None], (C, 1, w2.shape[0], w2.shape[1]))
    return jax.lax.conv_general_dilated(
        x, wt,
        window_strides=(1, 1),
        padding=[(ph, ph), (pw, pw)],
        dimension_numbers=("NCHW", "OIHW", "NCHW"),
        feature_group_count=C,
    )


if __name__ == "__main__":
    key = jax.random.PRNGKey(0)
    N, C, H, W = 2, 4, 16, 16
    x = jax.random.normal(key, (N, C, H, W), dtype=jnp.float32)

    out = gaussian_smoothing(x, kernel_size=3, sigma=1.0, padding=1)
    out = jax.block_until_ready(out)

    ref = reference_depthwise_conv(x, kernel_size=3, sigma=1.0, padding=1)
    assert out.shape == ref.shape
    assert float(jnp.max(jnp.abs(out - ref))) < 1e-5

    print("KERNEL_OK")
</pallas_src>

<mosaic_0001>
module attributes {stable_mosaic.version = 11 : i64} {
  func.func @kernel(%arg0: i32, %arg1: i32, %arg2: memref<1x4x256xf32, #tpu.memory_space<vmem>>, %arg3: memref<1x4x256xf32, #tpu.memory_space<vmem>>) attributes {dimension_semantics = [#tpu.dimension_semantics<parallel>, #tpu.dimension_semantics<parallel>], iteration_bounds = array<i64: 2, 1>, scalar_prefetch = 0 : i64, scratch_operands = 0 : i64, tpu.core_type = #tpu.core_type<tc>, window_params = [{transform_indices = @transform_0, window_bounds = array<i64: 1, 4, 256>}, {transform_indices = @transform_1, window_bounds = array<i64: 1, 4, 256>}]} {
    %c0 = arith.constant 0 : index
    %c0_0 = arith.constant 0 : index
    %c0_1 = arith.constant 0 : index
    %0 = vector.load %arg2[%c0, %c0_0, %c0_1] : memref<1x4x256xf32, #tpu.memory_space<vmem>>, vector<1x4x256xf32>
    %1 = vector.shape_cast %0 : vector<1x4x256xf32> to vector<4x256xf32>
    %2 = tpu.iota {dimensions = array<i32: 1>} : vector<4x256xi32>
    %c16_i32 = arith.constant 16 : i32
    %3 = vector.broadcast %c16_i32 : i32 to vector<4x256xi32>
    %4 = arith.cmpi sge, %2, %3 : vector<4x256xi32>
    %c240_i32 = arith.constant 240 : i32
    %5 = vector.broadcast %c240_i32 : i32 to vector<4x256xi32>
    %6 = arith.cmpi slt, %2, %5 : vector<4x256xi32>
    %c16_i32_2 = arith.constant 16 : i32
    %7 = tpu.dynamic_rotate %1 by %c16_i32_2 dim 1 : vector<4x256xf32>, i32 -> vector<4x256xf32>
    %cst = arith.constant 0.000000e+00 : f32
    %8 = vector.broadcast %cst : f32 to vector<4x256xf32>
    %9 = arith.select %4, %7, %8 : vector<4x256xi1>, vector<4x256xf32>
    %cst_3 = arith.constant 0.274068624 : f32
    %10 = vector.broadcast %cst_3 : f32 to vector<4x256xf32>
    %11 = arith.mulf %10, %9 : vector<4x256xf32>
    %cst_4 = arith.constant 0.451862752 : f32
    %12 = vector.broadcast %cst_4 : f32 to vector<4x256xf32>
    %13 = arith.mulf %12, %1 : vector<4x256xf32>
    %14 = arith.addf %11, %13 : vector<4x256xf32>
    %c240_i32_5 = arith.constant 240 : i32
    %15 = tpu.dynamic_rotate %1 by %c240_i32_5 dim 1 : vector<4x256xf32>, i32 -> vector<4x256xf32>
    %cst_6 = arith.constant 0.000000e+00 : f32
    %16 = vector.broadcast %cst_6 : f32 to vector<4x256xf32>
    %17 = arith.select %6, %15, %16 : vector<4x256xi1>, vector<4x256xf32>
    %cst_7 = arith.constant 0.274068624 : f32
    %18 = vector.broadcast %cst_7 : f32 to vector<4x256xf32>
    %19 = arith.mulf %18, %17 : vector<4x256xf32>
    %20 = arith.addf %14, %19 : vector<4x256xf32>
    %c15_i32 = arith.constant 15 : i32
    %21 = vector.broadcast %c15_i32 : i32 to vector<4x256xi32>
    %22 = arith.andi %2, %21 : vector<4x256xi32>
    %c1_i32 = arith.constant 1 : i32
    %23 = vector.broadcast %c1_i32 : i32 to vector<4x256xi32>
    %24 = arith.cmpi sge, %22, %23 : vector<4x256xi32>
    %c15_i32_8 = arith.constant 15 : i32
    %25 = vector.broadcast %c15_i32_8 : i32 to vector<4x256xi32>
    %26 = arith.cmpi slt, %22, %25 : vector<4x256xi32>
    %c1_i32_9 = arith.constant 1 : i32
    %27 = tpu.dynamic_rotate %20 by %c1_i32_9 dim 1 : vector<4x256xf32>, i32 -> vector<4x256xf32>
    %cst_10 = arith.constant 0.000000e+00 : f32
    %28 = vector.broadcast %cst_10 : f32 to vector<4x256xf32>
    %29 = arith.select %24, %27, %28 : vector<4x256xi1>, vector<4x256xf32>
    %cst_11 = arith.constant 0.274068624 : f32
    %30 = vector.broadcast %cst_11 : f32 to vector<4x256xf32>
    %31 = arith.mulf %30, %29 : vector<4x256xf32>
    %cst_12 = arith.constant 0.451862752 : f32
    %32 = vector.broadcast %cst_12 : f32 to vector<4x256xf32>
    %33 = arith.mulf %32, %20 : vector<4x256xf32>
    %34 = arith.addf %31, %33 : vector<4x256xf32>
    %c255_i32 = arith.constant 255 : i32
    %35 = tpu.dynamic_rotate %20 by %c255_i32 dim 1 : vector<4x256xf32>, i32 -> vector<4x256xf32>
    %cst_13 = arith.constant 0.000000e+00 : f32
    %36 = vector.broadcast %cst_13 : f32 to vector<4x256xf32>
    %37 = arith.select %26, %35, %36 : vector<4x256xi1>, vector<4x256xf32>
    %cst_14 = arith.constant 0.274068624 : f32
    %38 = vector.broadcast %cst_14 : f32 to vector<4x256xf32>
    %39 = arith.mulf %38, %37 : vector<4x256xf32>
    %40 = arith.addf %34, %39 : vector<4x256xf32>
    %c0_15 = arith.constant 0 : index
    %c0_16 = arith.constant 0 : index
    %c0_17 = arith.constant 0 : index
    %41 = vector.load %arg3[%c0_15, %c0_16, %c0_17] : memref<1x4x256xf32, #tpu.memory_space<vmem>>, vector<1x4x256xf32>
    %42 = vector.shape_cast %41 : vector<1x4x256xf32> to vector<4x256xf32>
    %43 = vector.shape_cast %40 : vector<4x256xf32> to vector<1x4x256xf32>
    tpu.vector_store %arg3[%c0_15, %c0_16, %c0_17], %43 {strides = array<i32>} : memref<1x4x256xf32, #tpu.memory_space<vmem>>, vector<1x4x256xf32>,
    return
  }
  func.func @transform_0(%arg0: i32, %arg1: i32) -> (i32, i32, i32) {
    %c0_i32 = arith.constant 0 : i32
    %c0_i32_0 = arith.constant 0 : i32
    return %arg0, %arg1, %c0_i32 : i32, i32, i32
  }
  func.func @transform_1(%arg0: i32, %arg1: i32) -> (i32, i32, i32) {
    %c0_i32 = arith.constant 0 : i32
    %c0_i32_0 = arith.constant 0 : i32
    return %arg0, %arg1, %c0_i32 : i32, i32, i32
  }
}

</mosaic_0001>

<llo_original>
// kernel: tpu_custom_call.1
$region0: #{tpu_custom_call.1}
  #allocation0 [shape = 'u32[]', space=smem, size = 0x4, offset = 0x4, fixed_abs, tag = 'smem constant byte address 0x4 - core index']
  #allocation1 [shape = 'u32[72,128]{1,0:T(1,128)}', space=vmem, size = 0x9000, scoped, tag = 'internal scratch']
  %s0 = inlined_call_operand.hbm [shape: f32[2,4,256], index: 0, kind: input, shape index: {}]
  %s1 = inlined_call_operand.hbm [shape: f32[2,4,256], index: 1, kind: output, shape index: {}]
  %s2 = sld [smem:[#allocation0]]
  $region41: #{tpu_custom_call.1} parent=0
    _
  %s4 = ssub.s32 1, %s2
  %s5 = scalar_select 0, %s4, %s2
  $region1: #{tpu_custom_call.1} parent=0
    #allocation2 [shape = 'u8[8192]{0}', space=vmem, size = 0x2000, scoped, tag = 'input window, operand 0']
    #allocation3 [shape = 's32[2]{0}', space=sflag, size = 0x8, scoped, tag = 'scoped memory for tpu_custom_call.1']
    #allocation4 [shape = 's32[2]{0}', space=sflag, size = 0x8, scoped, tag = 'scoped memory for tpu_custom_call.1']
    #allocation5 [shape = 'u8[8192]{0}', space=vmem, size = 0x2000, scoped, tag = 'output window, operand 0']
    %6 = vsyncpa [#allocation3], 0
    %s7 = scalar_lea.sflag [#allocation3], 1
    %8 = vsyncpa %s7, 0
    %9 = vsyncpa [#allocation4], 0
    %s10 = scalar_lea.sflag [#allocation4], 1
    %11 = vsyncpa %s10, 0
    loop: start=0, step=1, limit=4
    $region2: #{tpu_custom_call.1} parent=1 // loop_pre_header
      _
    $region3: #{tpu_custom_call.1} parent=1 // loop_header
      %s13 = sphi 0, %s17
      %p14 = scmp.ge.s32.totalorder %s13, 4
      %s20 = sphi 0, %s32
      %s21 = sphi 0, %s28
      %s22 = sphi 0, %s20
      %s23 = sphi 0, %s21
      %s24 = sphi 0, %s22
      %s25 = sphi 0, %s23
      %s37 = sphi 0, %s39
      %s40 = sphi 0, %s37
      %s41 = sphi 0, %s40
      %s57 = sphi 0, %s41
      %s65 = sphi 0, %s67
      %s68 = sphi 0, %s65
      %s69 = sphi 0, %s68
      %s85 = sphi 0, %s69
    $region4: #{tpu_custom_call.1} parent=1 // loop_header_branch
      %16 = sbr.rel (%p14) target = $region8
    $region5: #{tpu_custom_call.1} parent=1 // loop_body
      %s18 = ssub.s32 %s13, 1
      %s19 = ssub.s32 %s13, 2
      %s26 = sadd.s32 1, %s21
      %p27 = scmp.ge.s32.totalorder %s26, 1
      %s28 = scalar_select %p27, 0, %s26
      %s29 = sadd.s32 1, %s20
      %s30 = scalar_select %p27, %s29, %s20
      %p31 = scmp.ge.s32.totalorder %s30, 2
      %s32 = scalar_select %p31, 0, %s30
      %s33 = ssub.s32 %s20, %s32
      %s34 = ssub.s32 %s21, %s28
      %s35 = sor.u32 %s33, %s34
      %p36 = scmp.eq.s32.totalorder %s35, 0
      %s38 = sadd.s32 %s37, 1
      %s39 = scalar_select %p36, %s37, %s38
      %p42 = pneg %p36
      %p43 = scmp.eq.s32.totalorder %s13, 1
      %p44 = por %p42, %p43
      %p45 = scmp.ne.s32.totalorder %s37, %s40
      %p46 = scmp.eq.s32.totalorder %s13, 0
      %p47 = por %p45, %p46
      %p48 = scmp.ne.s32.totalorder %s37, %s40
      %p49 = scmp.eq.s32.totalorder %s18, 1
      %p50 = por %p48, %p49
      %p51 = scmp.ne.s32.totalorder %s40, %s41
      %p52 = scmp.eq.s32.totalorder %s18, 0
      %p53 = por %p51, %p52
      %p54 = scmp.ne.s32.totalorder %s40, %s41
      %p55 = scmp.eq.s32.totalorder %s19, 1
      %p56 = por %p54, %p55
      %p58 = scmp.ne.s32.totalorder %s41, %s57
      %p59 = scmp.eq.s32.totalorder %s19, 0
      %p60 = por %p58, %p59
      %s61 = ssub.s32 %s20, %s32
      %s62 = ssub.s32 %s21, %s28
      %s63 = sor.u32 %s61, %s62
      %p64 = scmp.eq.s32.totalorder %s63, 0
      %s66 = sadd.s32 %s65, 1
      %s67 = scalar_select %p64, %s65, %s66
      %p70 = pneg %p64
      %p71 = scmp.eq.s32.totalorder %s13, 1
      %p72 = por %p70, %p71
      %p73 = scmp.ne.s32.totalorder %s65, %s68
      %p74 = scmp.eq.s32.totalorder %s13, 0
      %p75 = por %p73, %p74
      %p76 = scmp.ne.s32.totalorder %s65, %s68
      %p77 = scmp.eq.s32.totalorder %s18, 1
      %p78 = por %p76, %p77
      %p79 = scmp.ne.s32.totalorder %s68, %s69
      %p80 = scmp.eq.s32.totalorder %s18, 0
      %p81 = por %p79, %p80
      %p82 = scmp.ne.s32.totalorder %s68, %s69
      %p83 = scmp.eq.s32.totalorder %s19, 1
      %p84 = por %p82, %p83
      %p86 = scmp.ne.s32.totalorder %s69, %s85
      %p87 = scmp.eq.s32.totalorder %s19, 0
      %p88 = por %p86, %p87
      %p89 = scmp.le.s32.totalorder 1, %s13
      %p90 = scmp.lt.s32.totalorder %s13, 3
      %p91 = pnand %p89, %p90
      %p92 = pneg %p91
      // Predicated region
      $region9: #{tpu_custom_call.1} parent=5 // pred_check
        _
      $region10: #{tpu_custom_call.1} parent=5 // pred_check_branch
        %94 = sbr.rel (%p91) target = $region12
      $region11: #{tpu_custom_call.1} parent=5 // pred_region
        %s95 = ssub.s32 %s13, 1
      $region12: #{tpu_custom_call.1} parent=5 // pred_fallthru
        _
      %p96 = scmp.lt.s32.totalorder %s13, 2
      // Predicated region
      $region13: #{tpu_custom_call.1} parent=5 // pred_check
        %p97 = pneg %p96
      $region14: #{tpu_custom_call.1} parent=5 // pred_check_branch
        %99 = sbr.rel (%p97) target = $region16
      $region15: #{tpu_custom_call.1} parent=5 // pred_region
        // Predicated region
        $region17: #{tpu_custom_call.1} parent=15 // pred_check
          %p100 = pneg %p47
        $region18: #{tpu_custom_call.1} parent=15 // pred_check_branch
          %102 = sbr.rel (%p100) target = $region20
        $region19: #{tpu_custom_call.1} parent=15 // pred_region
          %s103 = sand.u32 %s37, 1
          %s104 = scalar_lea.sflag [#allocation3], %s103
          %s105 = sand.u32 %s37, 1
          %s106 = smul.addr %s105, 8
          %s107 = scalar_lea.vmem [#allocation2], %s106
          %109 = vsyncadd %s104, 0
          %s110 = smul.addr %s21, 2
          %s111 = smul.addr %s20, 2
          %s112 = sadd.s32 %s110, %s111
          %s113 = smul.addr %s112, 4
          %s114 = scalar_lea.hbm %s0, %s113
          %s116 = sshll.u32 %s114, 4
          %s117 = int_to_ptr.hbm [resolvable:$true] %s116
          %s118 = sshll.u32 %s107, 4
          %s119 = int_to_ptr.vmem [resolvable:$true] %s118
          %121 = dma.hbm_to_vmem [thread:$0]  %s117, 128, %s119, %s104
        $region20: #{tpu_custom_call.1} parent=15 // pred_fallthru
          _
      $region16: #{tpu_custom_call.1} parent=5 // pred_fallthru
        _
      %p122 = scmp.le.s32.totalorder 1, %s13
      %p123 = scmp.lt.s32.totalorder %s13, 3
      %p124 = pnand %p122, %p123
      %p125 = pneg %p124
      // Predicated region
      $region21: #{tpu_custom_call.1} parent=5 // pred_check
        _
      $region22: #{tpu_custom_call.1} parent=5 // pred_check_branch
        %127 = sbr.rel (%p124) target = $region24
      $region23: #{tpu_custom_call.1} parent=5 // pred_region
        %s128 = ssub.s32 %s13, 1
        %s129 = sand.u32 %s40, 1
        %s130 = scalar_lea.sflag [#allocation3], %s129
        %s131 = sand.u32 %s40, 1
        %s132 = smul.addr %s131, 8
        %s133 = scalar_lea.vmem [#allocation2], %s132
        // Predicated region
        $region25: #{tpu_custom_call.1} parent=23 // pred_check
          %p134 = pneg %p53
        $region26: #{tpu_custom_call.1} parent=23 // pred_check_branch
          %136 = sbr.rel (%p134) target = $region28
        $region27: #{tpu_custom_call.1} parent=23 // pred_region
          %138 = dma.done %s130, 128
        $region28: #{tpu_custom_call.1} parent=23 // pred_fallthru
          _
        %s139 = sand.u32 %s40, 1
        %s140 = scalar_lea.sflag [#allocation3], %s139
        %s141 = sand.u32 %s40, 1
        %s142 = smul.addr %s141, 8
        %s143 = scalar_lea.vmem [#allocation2], %s142
        %p144 = pneg %p53
        %p145 = pneg %p50
        %p146 = pneg %p81
        %p147 = pneg %p78
        %s148 = sand.u32 %s68, 1
        %s149 = scalar_lea.sflag [#allocation4], %s148
        %s150 = sand.u32 %s68, 1
        %s151 = smul.addr %s150, 8
        %s152 = scalar_lea.vmem [#allocation5], %s151
        %v153 = vld [vmem:[%s133] sm:$0xff]
        %v154 = vlaneseq
        %v155 = vand.u32 %v154, 127
        %v156 = vadd.s32 %v155, 128
        %vm157 = vcmp.ge.s32.totalorder %v155, 16
        %vm158 = vcmp.ge.s32.totalorder %v156, 16
        %vm159 = vcmp.lt.s32.totalorder %v155, 240
        %vm160 = vcmp.lt.s32.totalorder %v156, 240
        %162 = vst [vmem:[#allocation1] ss:$2 sm:$0xff] %v153
        %v163 = vld.sshfl [vmem:[#allocation1] sm:$0xff pattern:$0x75316420]
        %v164 = vld.sshfl [vmem:[#allocation1 + $0x8] sm:$0xff pattern:$0x75316420]
        %167 = vrot.lane.b32.xlu0 %v163, 16
        %v168 = vpop.permute.xlu0 %167
        %169 = vrot.lane.b32.xlu0 %v164, 16
        %v170 = vpop.permute.xlu0 %169
        %vm171 = vcmp.lt.s32.totalorder %v155, 16
        %v172 = vsel %vm171, %v168, %v170
        %v173 = vsel %vm171, %v170, %v168
        %v174 = vsel %vm157, %v173, 0.0
        %v175 = vsel %vm158, %v172, 0.0
        %v176 = vmul.f32 %v174, 0.27406862
        %v177 = vmul.f32 %v175, 0.27406862
        %v178 = vmul.f32 %v153, 0.45186275
        %180 = vst [vmem:[#allocation1] ss:$2 sm:$0xff] %v178
        %v181 = vld.sshfl [vmem:[#allocation1] sm:$0xff pattern:$0x75316420]
        %v182 = vld.sshfl [vmem:[#allocation1 + $0x8] sm:$0xff pattern:$0x75316420]
        %v185 = vadd.f32 %v176, %v181
        %v186 = vadd.f32 %v177, %v182
        %187 = vst [vmem:[#allocation1] ss:$2 sm:$0xff] %v153
        %v188 = vld.sshfl [vmem:[#allocation1] sm:$0xff pattern:$0x75316420]
        %v189 = vld.sshfl [vmem:[#allocation1 + $0x8] sm:$0xff pattern:$0x75316420]
        %192 = vrot.lane.b32.xlu0 %v188, 112
        %v193 = vpop.permute.xlu0 %192
        %194 = vrot.lane.b32.xlu0 %v189, 112
        %v195 = vpop.permute.xlu0 %194
        %vm196 = vcmp.lt.s32.totalorder %v155, 112
        %v197 = vsel %vm196, %v193, %v195
        %v198 = vsel %vm196, %v195, %v193
        %v199 = vsel %vm159, %v197, 0.0
        %v200 = vsel %vm160, %v198, 0.0
        %v201 = vmul.f32 %v199, 0.27406862
        %v202 = vmul.f32 %v200, 0.27406862
        %v203 = vadd.f32 %v185, %v201
        %v204 = vadd.f32 %v186, %v202
        %v205 = vand.u32 %v155, 15
        %v206 = vand.u32 %v156, 15
        %vm207 = vcmp.ge.s32.totalorder %v205, 1
        %vm208 = vcmp.ge.s32.totalorder %v206, 1
        %vm209 = vcmp.lt.s32.totalorder %v205, 15
        %vm210 = vcmp.lt.s32.totalorder %v206, 15
        %211 = vrot.lane.b32.xlu0 %v203, 1
        %v212 = vpop.permute.xlu0 %211
        %213 = vrot.lane.b32.xlu0 %v204, 1
        %v214 = vpop.permute.xlu0 %213
        %vm215 = vcmp.lt.s32.totalorder %v155, 1
        %v216 = vsel %vm215, %v212, %v214
        %v217 = vsel %vm215, %v214, %v212
        %v218 = vsel %vm207, %v217, 0.0
        %v219 = vsel %vm208, %v216, 0.0
        %v220 = vmul.f32 %v218, 0.27406862
        %v221 = vmul.f32 %v219, 0.27406862
        %v222 = vmul.f32 %v203, 0.45186275
        %v223 = vmul.f32 %v204, 0.45186275
        %v224 = vadd.f32 %v220, %v222
        %v225 = vadd.f32 %v221, %v223
        %226 = vrot.lane.b32.xlu0 %v203, 127
        %v227 = vpop.permute.xlu0 %226
        %228 = vrot.lane.b32.xlu0 %v204, 127
        %v229 = vpop.permute.xlu0 %228
        %vm230 = vcmp.lt.s32.totalorder %v155, 127
        %v231 = vsel %vm230, %v227, %v229
        %v232 = vsel %vm230, %v229, %v227
        %v233 = vsel %vm209, %v231, 0.0
        %v234 = vsel %vm210, %v232, 0.0
        %v235 = vmul.f32 %v233, 0.27406862
        %v236 = vmul.f32 %v234, 0.27406862
        %v237 = vadd.f32 %v224, %v235
        %v238 = vadd.f32 %v225, %v236
        %v241 = vrot.slane %v238, 4
        %vm242 = vcmask 1043456
        %v243 = vsel %vm242, %v237, %v241
        %245 = vst [vmem:[%s152] sm:$0xff] %v243
        %s246 = sand.u32 %s68, 1
        %s247 = scalar_lea.sflag [#allocation4], %s246
        %s248 = sand.u32 %s68, 1
        %s249 = smul.addr %s248, 8
        %s250 = scalar_lea.vmem [#allocation5], %s249
        // Predicated region
        $region29: #{tpu_custom_call.1} parent=23 // pred_check
          %p251 = pneg %p78
        $region30: #{tpu_custom_call.1} parent=23 // pred_check_branch
          %253 = sbr.rel (%p251) target = $region32
        $region31: #{tpu_custom_call.1} parent=23 // pred_region
          %255 = vsyncadd %s247, 0
          %s256 = smul.addr %s23, 2
          %s257 = smul.addr %s22, 2
          %s258 = sadd.s32 %s256, %s257
          %s259 = smul.addr %s258, 4
          %s260 = scalar_lea.hbm %s1, %s259
          %s262 = sshll.u32 %s250, 4
          %s263 = int_to_ptr.vmem [resolvable:$true] %s262
          %s264 = sshll.u32 %s260, 4
          %s265 = int_to_ptr.hbm [resolvable:$true] %s264
          %267 = dma.vmem_to_hbm [thread:$0]  %s263, 128, %s265, %s247
        $region32: #{tpu_custom_call.1} parent=23 // pred_fallthru
          _
      $region24: #{tpu_custom_call.1} parent=5 // pred_fallthru
        _
      %p268 = scmp.le.s32.totalorder 2, %s13
      // Predicated region
      $region33: #{tpu_custom_call.1} parent=5 // pred_check
        %p269 = pneg %p268
      $region34: #{tpu_custom_call.1} parent=5 // pred_check_branch
        %271 = sbr.rel (%p269) target = $region36
      $region35: #{tpu_custom_call.1} parent=5 // pred_region
        %s272 = ssub.s32 %s13, 2
        // Predicated region
        $region37: #{tpu_custom_call.1} parent=35 // pred_check
          %p273 = pneg %p84
        $region38: #{tpu_custom_call.1} parent=35 // pred_check_branch
          %275 = sbr.rel (%p273) target = $region40
        $region39: #{tpu_custom_call.1} parent=35 // pred_region
          %s276 = sand.u32 %s69, 1
          %s277 = scalar_lea.sflag [#allocation4], %s276
          %s278 = sand.u32 %s69, 1
          %s279 = smul.addr %s278, 8
          %s280 = scalar_lea.vmem [#allocation5], %s279
          %282 = dma.done %s277, 128
        $region40: #{tpu_custom_call.1} parent=35 // pred_fallthru
          _
      $region36: #{tpu_custom_call.1} parent=5 // pred_fallthru
        _
    $region6: #{tpu_custom_call.1} parent=1 // loop_footer
      %s17 = sadd.s32 1, %s13
    $region7: #{tpu_custom_call.1} parent=1 // loop_footer_branch
      %12 = sbr.rel target = $region3
    $region8: #{tpu_custom_call.1} parent=1 // loop_exit
      _
    %283 = vsyncpa [#allocation3], 1
    %s284 = scalar_lea.sflag [#allocation3], 1
    %285 = vsyncpa %s284, 1
    %286 = vsyncpa [#allocation4], 1
    %s287 = scalar_lea.sflag [#allocation4], 1
    %288 = vsyncpa %s287, 1

</llo_original>
